<compile_context>
chip_gen: v6e
topology: v6e:2x2x1
jax: 0.10.0
libtpu: 0.0.40
codegen_flags: <defaults>
</compile_context>

<pallas_src>
import functools

import jax
import jax.numpy as jnp
from jax.experimental import pallas as pl
from jax.experimental.pallas import tpu as pltpu


def _rmsnorm_kernel(x_ref, w_ref, o_ref, *, eps, inv_c):
    # x_ref: (tile_rows, C) tile in VMEM ; w_ref: (1, C) resident weight (out dtype).
    x = x_ref[...].astype(jnp.float32)
    # mean-of-squares as sum * (1/C): row reduce -> XLU, rsqrt -> EUP (off VPU slots).
    ms = jnp.sum(x * x, axis=-1, keepdims=True) * inv_c
    inv = jax.lax.rsqrt(ms + eps)
    normed = (x * inv).astype(x_ref.dtype)                 # matches .type_as(x)
    o_ref[...] = normed.astype(o_ref.dtype) * w_ref[...]


def _vmem_capacity_bytes():
    """Physical VMEM per TensorCore; conservative fallback if the query fails."""
    try:
        cap = int(getattr(pltpu.get_tpu_info(), "vmem_capacity_bytes", 0))
        if cap > 0:
            return cap
    except Exception:
        pass
    return 64 << 20      # v7x per-TensorCore VMEM (smallest of v5e/v6e/v7x)


def _pick_tile_rows(rows, C, in_dtype, out_dtype, vmem_capacity):
    """Row-tile sized against VMEM.

    Accounts for double-buffered in/out block buffers PLUS the in-kernel f32
    intermediates, applies a bytes-based floor (~2 MiB per input DMA buffer)
    so small-C tiles still amortise the ~0.35us per-grid-step overhead, and
    exposes >= 8 grid steps when possible so megacore (v7x) splits the
    parallel row axis evenly with warm DMA pipelines on both cores.
    """
    in_b = jnp.dtype(in_dtype).itemsize
    out_b = jnp.dtype(out_dtype).itemsize
    pack = 8 * max(1, 4 // in_b)        # sublane packing: 8 f32 / 16 bf16 / 32 int8

    if rows <= pack:
        return int(rows)                # full-array block (always legal)

    # Per-row VMEM cost: 2x input block (double buffered) + 2x output block
    # + ~3 f32 rows of materialized intermediates (upcast x, x*inv, pre-cast).
    bytes_per_row = 2 * C * in_b + 2 * C * out_b + 3 * C * 4

    soft_budget = vmem_capacity // 6    # ~10 MiB on v7x, ~21 MiB on v5e/v6e
    hard_budget = vmem_capacity // 4
    tile = soft_budget // bytes_per_row

    # Bytes-based floor: keep each input DMA buffer >= ~2 MiB for small/medium C,
    # but never exceed the hard VMEM budget.
    floor_rows = (2 << 20) // max(1, C * in_b)
    tile = max(tile, min(floor_rows, hard_budget // bytes_per_row))

    tile = max(pack, (min(tile, rows) // pack) * pack)

    # >= 8 total grid steps (>= 4 per TensorCore on v7x) when the problem is
    # big enough: bounds load imbalance and keeps each core's pipeline warm.
    target_steps = 8
    if rows >= target_steps * pack:
        cap = (rows // target_steps // pack) * pack
        if cap >= pack:
            tile = min(tile, cap)

    return int(max(pack, tile))


def wan_rms_norm(x, weight, eps=1e-5, *, tile_rows=None, output_in_input_dtype=True):
    """x: [B, L, C], weight: [C]. Same math as WanRMSNorm.forward.

    output_in_input_dtype=True (default, faster): output in x.dtype, halving HBM
    writeback for bf16 inputs.  Set False for PyTorch's exact bf16*f32 -> f32
    promotion on the final multiply.
    """
    B, L, C = x.shape
    rows = B * L

    if output_in_input_dtype:
        out_dtype = x.dtype
    else:
        # PyTorch: normed.type_as(x) * weight -> promotes with the (f32) weight.
        out_dtype = jnp.result_type(x.dtype, weight.dtype)

    x2d = x.reshape(rows, C)
    # Pre-cast the resident weight block to the output dtype (no per-step cast).
    w2d = weight.reshape(1, C).astype(out_dtype)

    vmem_capacity = _vmem_capacity_bytes()
    if tile_rows is None:
        tile_rows = _pick_tile_rows(rows, C, x.dtype, out_dtype, vmem_capacity)

    grid = (pl.cdiv(rows, tile_rows),)   # non-divisible tail: padded reads,
                                         # dropped OOB writes; rows independent.

    # NOTE: real Wan dims (C = 1536 / 5120) are multiples of 128, so output
    # stores are lane-dense; tiny-C callers would hit masked partial stores.
    out2d = pl.pallas_call(
        functools.partial(_rmsnorm_kernel, eps=float(eps), inv_c=1.0 / C),
        out_shape=jax.ShapeDtypeStruct((rows, C), out_dtype),
        grid_spec=pltpu.PrefetchScalarGridSpec(
            num_scalar_prefetch=0,
            grid=grid,
            in_specs=[
                pl.BlockSpec((tile_rows, C), lambda i: (i, 0)),
                pl.BlockSpec((1, C), lambda i: (0, 0)),   # constant index -> resident
            ],
            out_specs=pl.BlockSpec((tile_rows, C), lambda i: (i, 0)),
        ),
        compiler_params=pltpu.CompilerParams(
            dimension_semantics=("parallel",),
            # Half of physical VMEM: 32 MiB on v7x, 64 MiB on v5e/v6e — ample
            # headroom over the <= capacity/4 tile budget (intermediates included).
            vmem_limit_bytes=int(vmem_capacity // 2),
        ),
    )(x2d, w2d)

    return out2d.reshape(B, L, C)


def _reference(x, weight, eps=1e-5):
    xf = x.astype(jnp.float32)
    normed = xf * jax.lax.rsqrt(jnp.mean(xf * xf, axis=-1, keepdims=True) + eps)
    return normed.astype(x.dtype) * weight


if __name__ == "__main__":
    key = jax.random.PRNGKey(0)
    k1, k2, k3, k4 = jax.random.split(key, 4)
    eps = 1e-5

    # Case 1: f32 input, module-consistent toy dims [B, L, C].
    B, L, C = 2, 8, 32
    x = jax.random.normal(k1, (B, L, C), dtype=jnp.float32)
    w = 1.0 + 0.1 * jax.random.normal(k2, (C,), dtype=jnp.float32)

    y = jax.block_until_ready(wan_rms_norm(x, w, eps=eps))
    y_ref = _reference(x, w, eps=eps)
    assert y.shape == (B, L, C) and y.dtype == jnp.float32
    assert jnp.allclose(y, y_ref, atol=1e-5, rtol=1e-5)

    # Case 2: bf16 input, lane-aligned C, non-divisible row count (tail grid step).
    B2, L2, C2 = 2, 13, 128
    xb = jax.random.normal(k3, (B2, L2, C2), dtype=jnp.float32).astype(jnp.bfloat16)
    wb = 1.0 + 0.1 * jax.random.normal(k4, (C2,), dtype=jnp.float32)
    yb_ref = _reference(xb, wb, eps=eps)           # f32 (PyTorch promotion)

    # 2a: default fast path -> output stays bf16 (halved HBM writeback).
    yb = jax.block_until_ready(wan_rms_norm(xb, wb, eps=eps))
    assert yb.shape == (B2, L2, C2) and yb.dtype == jnp.bfloat16
    assert jnp.allclose(yb.astype(jnp.float32), yb_ref, atol=2e-2, rtol=2e-2)

    # 2b: PyTorch-exact promotion (bf16 x * f32 weight -> f32 output).
    yb32 = jax.block_until_ready(
        wan_rms_norm(xb, wb, eps=eps, output_in_input_dtype=False))
    assert yb32.dtype == jnp.float32
    assert jnp.allclose(yb32, yb_ref, atol=2e-2, rtol=2e-2)

    # Case 3: enough rows to exercise the multi-step (>= 8) parallel grid.
    B3, L3, C3 = 2, 256, 128
    x3 = jax.random.normal(k1, (B3, L3, C3), dtype=jnp.float32)
    w3 = jnp.ones((C3,), dtype=jnp.float32)        # WanRMSNorm init: ones(dim)
    y3 = jax.block_until_ready(wan_rms_norm(x3, w3, eps=eps))
    assert jnp.allclose(y3, _reference(x3, w3, eps=eps), atol=1e-5, rtol=1e-5)

    print("KERNEL_OK")
</pallas_src>

<mosaic_0001>
module attributes {stable_mosaic.version = 11 : i64} {
  func.func @_rmsnorm_kernel(%arg0: i32, %arg1: memref<16x32xf32, #tpu.memory_space<vmem>>, %arg2: memref<1x32xf32, #tpu.memory_space<vmem>>, %arg3: memref<16x32xf32, #tpu.memory_space<vmem>>) attributes {dimension_semantics = [#tpu.dimension_semantics<parallel>], iteration_bounds = array<i64: 1>, scalar_prefetch = 0 : i64, scratch_operands = 0 : i64, tpu.core_type = #tpu.core_type<tc>, window_params = [{transform_indices = @transform_0, window_bounds = array<i64: 16, 32>}, {pipeline_mode = #tpu.pipeline_mode<synchronous>, transform_indices = @transform_1, window_bounds = array<i64: 1, 32>}, {transform_indices = @transform_2, window_bounds = array<i64: 16, 32>}]} {
    %c0 = arith.constant 0 : index
    %c0_0 = arith.constant 0 : index
    %0 = vector.load %arg1[%c0, %c0_0] : memref<16x32xf32, #tpu.memory_space<vmem>>, vector<16x32xf32>
    %1 = arith.mulf %0, %0 : vector<16x32xf32>
    %cst = arith.constant dense<0.000000e+00> : vector<16xf32>
    %2 = vector.multi_reduction <add>, %1, %cst [1] : vector<16x32xf32> to vector<16xf32>
    %3 = vector.shape_cast %2 : vector<16xf32> to vector<16x1xf32>
    %cst_1 = arith.constant 3.125000e-02 : f32
    %4 = vector.broadcast %cst_1 : f32 to vector<16x1xf32>
    %5 = arith.mulf %3, %4 : vector<16x1xf32>
    %cst_2 = arith.constant 9.99999974E-6 : f32
    %6 = vector.broadcast %cst_2 : f32 to vector<16x1xf32>
    %7 = arith.addf %5, %6 : vector<16x1xf32>
    %8 = math.rsqrt %7 : vector<16x1xf32>
    %9 = vector.broadcast %8 : vector<16x1xf32> to vector<16x32xf32>
    %10 = arith.mulf %0, %9 : vector<16x32xf32>
    %c0_3 = arith.constant 0 : index
    %c0_4 = arith.constant 0 : index
    %11 = vector.load %arg2[%c0_3, %c0_4] : memref<1x32xf32, #tpu.memory_space<vmem>>, vector<1x32xf32>
    %12 = vector.broadcast %11 : vector<1x32xf32> to vector<16x32xf32>
    %13 = arith.mulf %10, %12 : vector<16x32xf32>
    %c0_5 = arith.constant 0 : index
    %c0_6 = arith.constant 0 : index
    %14 = vector.load %arg3[%c0_5, %c0_6] : memref<16x32xf32, #tpu.memory_space<vmem>>, vector<16x32xf32>
    tpu.vector_store %arg3[%c0_5, %c0_6], %13 {strides = array<i32>} : memref<16x32xf32, #tpu.memory_space<vmem>>, vector<16x32xf32>,
    return
  }
  func.func @transform_0(%arg0: i32) -> (i32, i32) {
    %c0_i32 = arith.constant 0 : i32
    %c0_i32_0 = arith.constant 0 : i32
    return %arg0, %c0_i32 : i32, i32
  }
  func.func @transform_1(%arg0: i32) -> (i32, i32) {
    %c0_i32 = arith.constant 0 : i32
    %c0_i32_0 = arith.constant 0 : i32
    %c0_i32_1 = arith.constant 0 : i32
    return %c0_i32, %c0_i32_0 : i32, i32
  }
  func.func @transform_2(%arg0: i32) -> (i32, i32) {
    %c0_i32 = arith.constant 0 : i32
    %c0_i32_0 = arith.constant 0 : i32
    return %arg0, %c0_i32 : i32, i32
  }
}

</mosaic_0001>

<llo_original>
// kernel: tpu_custom_call.1
$region0: #{tpu_custom_call.1}
  #allocation0 [shape = 'u32[]', space=smem, size = 0x4, offset = 0x4, fixed_abs, tag = 'smem constant byte address 0x4 - core index']
  #allocation1 [shape = 'u32[144,128]{1,0:T(1,128)}', space=vmem, size = 0x12000, scoped, tag = 'internal scratch']
  %s0 = inlined_call_operand.hbm [shape: f32[16,32], index: 0, kind: input, shape index: {}]
  %s1 = inlined_call_operand.vmem [shape: f32[1,32], index: 1, kind: input, shape index: {}]
  %s2 = inlined_call_operand.hbm [shape: f32[16,32], index: 2, kind: output, shape index: {}]
  %s3 = sld [smem:[#allocation0]]
  $region22: #{tpu_custom_call.1} parent=0
    _
  %s5 = ssub.s32 1, %s3
  %s6 = scalar_select 0, %s5, %s3
  $region1: #{tpu_custom_call.1} parent=0
    #allocation2 [shape = 'u8[8192]{0}', space=vmem, size = 0x2000, scoped, tag = 'input window, operand 0, single buffered']
    #allocation3 [shape = 's32[1]{0}', space=sflag, size = 0x4, scoped, tag = 'scoped memory for tpu_custom_call.1']
    #allocation4 [shape = 's32[1]{0}', space=sflag, size = 0x4, scoped, tag = 'scoped memory for tpu_custom_call.1']
    #allocation5 [shape = 'u8[8192]{0}', space=vmem, size = 0x2000, scoped, tag = 'output window, operand 0, single buffered']
    %7 = vsyncpa [#allocation3], 0
    %8 = vsyncpa [#allocation4], 0
    // Predicated region
    $region2: #{tpu_custom_call.1} parent=1 // pred_check
      _
    $region3: #{tpu_custom_call.1} parent=1 // pred_check_branch
      %10 = sbr.rel (0) target = $region5
    $region4: #{tpu_custom_call.1} parent=1 // pred_region
      %s12 = ssub.s32 256, 256
      %13 = vsyncadd [#allocation3], %s12
      %s14 = sshll.u32 [#allocation2], 4
      %s15 = int_to_ptr.vmem [resolvable:$true] %s14
      %20 = dma.hbm_to_vmem [thread:$0]  %s0, 256, %s15, [#allocation3], 128, 128, 8
    $region5: #{tpu_custom_call.1} parent=1 // pred_fallthru
      _
    // Predicated region
    $region6: #{tpu_custom_call.1} parent=1 // pred_check
      _
    $region7: #{tpu_custom_call.1} parent=1 // pred_check_branch
      %22 = sbr.rel (0) target = $region9
    $region8: #{tpu_custom_call.1} parent=1 // pred_region
      _
    $region9: #{tpu_custom_call.1} parent=1 // pred_fallthru
      _
    // Predicated region
    $region10: #{tpu_custom_call.1} parent=1 // pred_check
      _
    $region11: #{tpu_custom_call.1} parent=1 // pred_check_branch
      %24 = sbr.rel (0) target = $region13
    $region12: #{tpu_custom_call.1} parent=1 // pred_region
      %25 = dma.done [#allocation3], 256
    $region13: #{tpu_custom_call.1} parent=1 // pred_fallthru
      _
    %v26 = vld [vmem:[#allocation2] sm:$0xff]
    %v27 = vld [vmem:[#allocation2 + $0x8] sm:$0xff]
    %v28 = vmul.f32 %v26, %v26
    %v29 = vmul.f32 %v27, %v27
    %vm30 = vcmask 261120
    %v31 = vsel %vm30, %v28, 0.0
    %32 = vadd.xlane.f32.xlu0 %v31
    %v33 = vpop.xlane.xlu0 %32
    %v34 = vsel %vm30, %v29, 0.0
    %35 = vadd.xlane.f32.xlu0 %v34
    %v36 = vpop.xlane.xlu0 %35
    %v37 = vmul.f32 %v33, 0.03125
    %v38 = vmul.f32 %v36, 0.03125
    %v39 = vadd.f32 %v37, 1e-05
    %v40 = vadd.f32 %v38, 1e-05
    %v41 = vrsqrt.pop %v39
    %v42 = vrsqrt.pop %v40
    %v43 = vmul.f32 %v26, %v41
    %v44 = vmul.f32 %v27, %v42
    %v45 = vld [vmem:[%s1] sm:$0x1]
    %v47 = vlaneseq
    %v48 = vshrl.u32 %v47, 7
    %v49 = vsub.s32 0, %v48
    %v50 = vrot.slane %v45, %v49
    %v52 = vmul.f32 %v43, %v50
    %v53 = vmul.f32 %v44, %v50
    %54 = vst.msk [vmem:[#allocation5] sm:$0xff] %vm30, %v52
    %55 = vst.msk [vmem:[#allocation5 + $0x8] sm:$0xff] %vm30, %v53
    // Predicated region
    $region14: #{tpu_custom_call.1} parent=1 // pred_check
      _
    $region15: #{tpu_custom_call.1} parent=1 // pred_check_branch
      %57 = sbr.rel (0) target = $region17
    $region16: #{tpu_custom_call.1} parent=1 // pred_region
      %s59 = ssub.s32 256, 256
      %60 = vsyncadd [#allocation4], %s59
      %s61 = sshll.u32 [#allocation5], 4
      %s62 = int_to_ptr.vmem [resolvable:$true] %s61
      %67 = dma.vmem_to_hbm [thread:$0]  %s62, 256, %s2, [#allocation4], 128, 128, 8
    $region17: #{tpu_custom_call.1} parent=1 // pred_fallthru
      _
    // Predicated region
    $region18: #{tpu_custom_call.1} parent=1 // pred_check
      _
    $region19: #{tpu_custom_call.1} parent=1 // pred_check_branch
      %69 = sbr.rel (0) target = $region21
    $region20: #{tpu_custom_call.1} parent=1 // pred_region
      %70 = dma.done [#allocation4], 256
    $region21: #{tpu_custom_call.1} parent=1 // pred_fallthru
      _
    %71 = vsyncpa [#allocation3], 1
    %72 = vsyncpa [#allocation4], 1

</llo_original>
